<compile_context>
chip_gen: v5e
topology: v5e:2x2
jax: 0.10.0
libtpu: 0.0.40
codegen_flags: <defaults>
</compile_context>

<pallas_src>
import jax
import jax.numpy as jnp
from jax.experimental import pallas as pl
from jax.experimental.pallas import tpu as pltpu


def _ste_tanh_kernel(x_ref, o_ref):
    # Elementwise tanh on the whole VMEM tile. The transcendental goes to the
    # EUP slot, which is free alongside the load/store/DMA slots for a
    # memory-bound op. Input dtype is preserved end-to-end.
    o_ref[...] = jnp.tanh(x_ref[...])


# Below this element count the pallas_call fixed cost (and any relayout of the
# input view) dominates; plain jnp.tanh also lets XLA fuse into neighbours.
_MIN_KERNEL_ELEMS = 64 * 1024


def _sublane_multiple(dtype) -> int:
    # Minimum sublane tiling multiple per element width.
    itemsize = jnp.dtype(dtype).itemsize
    return {4: 8, 2: 16, 1: 32}.get(itemsize, 8)


def _target_tile_bytes() -> int:
    # ~2 MiB amortizes the ~0.35 us/grid-step overhead at v5e/v6e bandwidths.
    # On v7x a 2 MiB tile streams in ~1.3 us, so use 8 MiB tiles there.
    try:
        kind = jax.devices()[0].device_kind.lower()
    except Exception:  # no devices visible at trace time
        kind = ""
    if "v7" in kind or "7x" in kind:
        return 8 * 1024 * 1024
    return 2 * 1024 * 1024


def _as_2d_view(x: jax.Array, tile_bytes: int):
    """Return a (rows, lanes) view of x obtainable WITHOUT padding, or None.

    Preference order:
      1. Collapse leading dims, keep the trailing dim: guaranteed
         layout-preserving reshape when the last dim is a multiple of 128 and
         the second-to-last dim is a multiple of the sublane tile.
      2. Flatten to (n // lanes, lanes) with the widest lanes in
         {1024, 512, 256, 128} dividing n (may relayout, but never pads).
    """
    n = x.size
    itemsize = jnp.dtype(x.dtype).itemsize
    sub = _sublane_multiple(x.dtype)

    if x.ndim >= 2:
        c = x.shape[-1]
        if (c % 128 == 0
                and x.shape[-2] % sub == 0
                and c * sub * itemsize <= 2 * tile_bytes):
            return x.reshape(n // c, c)

    if n % 128 == 0:
        lanes = 128
        for cand in (1024, 512, 256):
            if n % cand == 0:
                lanes = cand
                break
        return x.reshape(n // lanes, lanes)

    return None


def ste_tanh(x: jax.Array) -> jax.Array:
    """Forward of STETanh: y = tanh(x). Shape and floating dtype preserved."""
    n = x.size
    if (n == 0
            or not jnp.issubdtype(x.dtype, jnp.floating)
            or n < _MIN_KERNEL_ELEMS):
        # Tiny / non-float inputs: delegate to XLA (fuses, no launch cost).
        return jnp.tanh(x)

    tile_bytes = _target_tile_bytes()
    x2d = _as_2d_view(x, tile_bytes)
    if x2d is None:
        # TODO(synk): sizes with n % 128 != 0 would need an in-kernel masked
        # tail (scalar-prefetch n + pltpu.store mask); plain jnp.tanh is
        # copy-free and already HBM-bound, so fall back rather than paying a
        # full-tensor pad + slice round trip.
        return jnp.tanh(x)

    rows, lanes = x2d.shape
    dtype = x.dtype
    itemsize = jnp.dtype(dtype).itemsize
    sub = _sublane_multiple(dtype)

    # Row block: ~tile_bytes per block, rounded to the dtype sublane multiple,
    # capped so it never exceeds the (sublane-rounded) row count and so the
    # grid has >= 2 steps when there is enough work (v7x 2-TC sharding).
    tr = max(sub, (tile_bytes // (lanes * itemsize)) // sub * sub)
    rows_ceil = ((rows + sub - 1) // sub) * sub
    tr = min(tr, rows_ceil)
    if rows > 2 * sub:
        half = ((pl.cdiv(rows, 2) + sub - 1) // sub) * sub
        tr = min(tr, max(sub, half))

    block_bytes = tr * lanes * itemsize
    grid = (pl.cdiv(rows, tr),)

    out = pl.pallas_call(
        _ste_tanh_kernel,
        out_shape=jax.ShapeDtypeStruct((rows, lanes), dtype),
        grid_spec=pltpu.PrefetchScalarGridSpec(
            num_scalar_prefetch=0,
            grid=grid,
            in_specs=[pl.BlockSpec((tr, lanes), lambda i: (i, 0))],
            out_specs=pl.BlockSpec((tr, lanes), lambda i: (i, 0)),
        ),
        compiler_params=pltpu.CompilerParams(
            # TODO(synk): verify via xprof that a 1-D "parallel" grid shards
            # across v7x's two TensorCores; switch to CORE_PARALLEL if not.
            dimension_semantics=("parallel",),
            # Double-buffered input + output blocks, plus slack.
            vmem_limit_bytes=4 * block_bytes + 4 * 1024 * 1024,
        ),
    )(x2d)

    return out.reshape(x.shape)


if __name__ == "__main__":
    key = jax.random.PRNGKey(0)
    k0, k1, k2, k3, k4 = jax.random.split(key, 5)

    # 1) Small NCHW input typical of where STETanh sits (small-input fallback).
    x_small = jax.random.normal(k0, (2, 4, 16, 16), dtype=jnp.float32)
    y_small = ste_tanh(x_small)
    jax.block_until_ready(y_small)
    assert y_small.shape == x_small.shape and y_small.dtype == x_small.dtype
    assert jnp.allclose(y_small, jnp.tanh(x_small), atol=1e-6, rtol=1e-6)

    # 2) Lane-friendly NCHW activation: leading-dim-collapse kernel path
    #    (zero-copy (2048, 128) view, 2-step grid).
    x_a = jax.random.normal(k1, (8, 4, 64, 128), dtype=jnp.float32)
    y_a = ste_tanh(x_a)
    jax.block_until_ready(y_a)
    assert y_a.shape == x_a.shape and y_a.dtype == x_a.dtype
    assert jnp.allclose(y_a, jnp.tanh(x_a), atol=1e-6, rtol=1e-6)

    # 3) Lane-hostile leading dims but size divisible by 1024: flat
    #    (126, 1024) path with a partial final row-block (no pad, no slice).
    x_b = jax.random.normal(k2, (7, 3, 6144), dtype=jnp.float32)
    y_b = ste_tanh(x_b)
    jax.block_until_ready(y_b)
    assert y_b.shape == x_b.shape and y_b.dtype == x_b.dtype
    assert jnp.allclose(y_b, jnp.tanh(x_b), atol=1e-6, rtol=1e-6)

    # 4) bf16 input: dtype preserved end-to-end (halves HBM bytes moved).
    x_c = jax.random.normal(k3, (512, 1024)).astype(jnp.bfloat16)
    y_c = ste_tanh(x_c)
    jax.block_until_ready(y_c)
    assert y_c.dtype == jnp.bfloat16 and y_c.shape == x_c.shape
    assert jnp.allclose(y_c.astype(jnp.float32),
                        jnp.tanh(x_c.astype(jnp.float32)), atol=2e-2, rtol=2e-2)

    # 5) Ragged element count (n % 128 != 0): copy-free jnp.tanh fallback.
    x_d = jax.random.normal(k4, (515, 259), dtype=jnp.float32)
    y_d = ste_tanh(x_d)
    jax.block_until_ready(y_d)
    assert jnp.allclose(y_d, jnp.tanh(x_d), atol=1e-6, rtol=1e-6)

    print("KERNEL_OK")
</pallas_src>

<mosaic_0001>
module attributes {stable_mosaic.version = 11 : i64} {
  func.func @_ste_tanh_kernel(%arg0: i32, %arg1: memref<1024x128xf32, #tpu.memory_space<vmem>>, %arg2: memref<1024x128xf32, #tpu.memory_space<vmem>>) attributes {dimension_semantics = [#tpu.dimension_semantics<parallel>], iteration_bounds = array<i64: 2>, scalar_prefetch = 0 : i64, scratch_operands = 0 : i64, tpu.core_type = #tpu.core_type<tc>, window_params = [{transform_indices = @transform_0, window_bounds = array<i64: 1024, 128>}, {transform_indices = @transform_1, window_bounds = array<i64: 1024, 128>}]} {
    %c0 = arith.constant 0 : index
    %c0_0 = arith.constant 0 : index
    %0 = vector.load %arg1[%c0, %c0_0] : memref<1024x128xf32, #tpu.memory_space<vmem>>, vector<1024x128xf32>
    %1 = math.tanh %0 : vector<1024x128xf32>
    %c0_1 = arith.constant 0 : index
    %c0_2 = arith.constant 0 : index
    %2 = vector.load %arg2[%c0_1, %c0_2] : memref<1024x128xf32, #tpu.memory_space<vmem>>, vector<1024x128xf32>
    tpu.vector_store %arg2[%c0_1, %c0_2], %1 {strides = array<i32>} : memref<1024x128xf32, #tpu.memory_space<vmem>>, vector<1024x128xf32>,
    return
  }
  func.func @transform_0(%arg0: i32) -> (i32, i32) {
    %c0_i32 = arith.constant 0 : i32
    %c0_i32_0 = arith.constant 0 : i32
    return %arg0, %c0_i32 : i32, i32
  }
  func.func @transform_1(%arg0: i32) -> (i32, i32) {
    %c0_i32 = arith.constant 0 : i32
    %c0_i32_0 = arith.constant 0 : i32
    return %arg0, %c0_i32 : i32, i32
  }
}

</mosaic_0001>

<llo_original>
// kernel: tpu_custom_call.1
$region0: #{tpu_custom_call.1}
  #allocation0 [shape = 'u32[]', space=smem, size = 0x4, offset = 0x4, fixed_abs, tag = 'smem constant byte address 0x4 - core index']
  #allocation1 [shape = 'u32[72,128]{1,0:T(1,128)}', space=vmem, size = 0x9000, scoped, tag = 'internal scratch']
  %s0 = inlined_call_operand.hbm [shape: f32[2048,128], index: 0, kind: input, shape index: {}]
  %s1 = inlined_call_operand.hbm [shape: f32[2048,128], index: 1, kind: output, shape index: {}]
  %s2 = sld [smem:[#allocation0]]
  $region41: #{tpu_custom_call.1} parent=0
    _
  %s4 = ssub.s32 1, %s2
  %s5 = scalar_select 0, %s4, %s2
  $region1: #{tpu_custom_call.1} parent=0
    #allocation2 [shape = 'u8[1048576]{0}', space=vmem, size = 0x100000, scoped, tag = 'input window, operand 0']
    #allocation3 [shape = 's32[2]{0}', space=sflag, size = 0x8, scoped, tag = 'scoped memory for tpu_custom_call.1']
    #allocation4 [shape = 's32[2]{0}', space=sflag, size = 0x8, scoped, tag = 'scoped memory for tpu_custom_call.1']
    #allocation5 [shape = 'u8[1048576]{0}', space=vmem, size = 0x100000, scoped, tag = 'output window, operand 0']
    %6 = vsyncpa [#allocation3], 0
    %s7 = scalar_lea.sflag [#allocation3], 1
    %8 = vsyncpa %s7, 0
    %9 = vsyncpa [#allocation4], 0
    %s10 = scalar_lea.sflag [#allocation4], 1
    %11 = vsyncpa %s10, 0
    loop: start=0, step=1, limit=4
    $region2: #{tpu_custom_call.1} parent=1 // loop_pre_header
      _
    $region3: #{tpu_custom_call.1} parent=1 // loop_header
      %s13 = sphi 0, %s17
      %p14 = scmp.ge.s32.totalorder %s13, 4
      %s23 = sphi 0, %s25
      %s26 = sphi 0, %s23
      %s27 = sphi 0, %s26
      %s43 = sphi 0, %s27
      %s49 = sphi 0, %s51
      %s52 = sphi 0, %s49
      %s53 = sphi 0, %s52
      %s69 = sphi 0, %s53
    $region4: #{tpu_custom_call.1} parent=1 // loop_header_branch
      %16 = sbr.rel (%p14) target = $region8
    $region5: #{tpu_custom_call.1} parent=1 // loop_body
      %s18 = ssub.s32 %s13, 1
      %s19 = ssub.s32 %s13, 2
      %s20 = sadd.s32 %s13, 1
      %s21 = ssub.s32 %s13, %s20
      %p22 = scmp.eq.s32.totalorder %s21, 0
      %s24 = sadd.s32 %s23, 1
      %s25 = scalar_select %p22, %s23, %s24
      %p28 = pneg %p22
      %p29 = scmp.eq.s32.totalorder %s13, 1
      %p30 = por %p28, %p29
      %p31 = scmp.ne.s32.totalorder %s23, %s26
      %p32 = scmp.eq.s32.totalorder %s13, 0
      %p33 = por %p31, %p32
      %p34 = scmp.ne.s32.totalorder %s23, %s26
      %p35 = scmp.eq.s32.totalorder %s18, 1
      %p36 = por %p34, %p35
      %p37 = scmp.ne.s32.totalorder %s26, %s27
      %p38 = scmp.eq.s32.totalorder %s18, 0
      %p39 = por %p37, %p38
      %p40 = scmp.ne.s32.totalorder %s26, %s27
      %p41 = scmp.eq.s32.totalorder %s19, 1
      %p42 = por %p40, %p41
      %p44 = scmp.ne.s32.totalorder %s27, %s43
      %p45 = scmp.eq.s32.totalorder %s19, 0
      %p46 = por %p44, %p45
      %s47 = ssub.s32 %s13, %s20
      %p48 = scmp.eq.s32.totalorder %s47, 0
      %s50 = sadd.s32 %s49, 1
      %s51 = scalar_select %p48, %s49, %s50
      %p54 = pneg %p48
      %p55 = scmp.eq.s32.totalorder %s13, 1
      %p56 = por %p54, %p55
      %p57 = scmp.ne.s32.totalorder %s49, %s52
      %p58 = scmp.eq.s32.totalorder %s13, 0
      %p59 = por %p57, %p58
      %p60 = scmp.ne.s32.totalorder %s49, %s52
      %p61 = scmp.eq.s32.totalorder %s18, 1
      %p62 = por %p60, %p61
      %p63 = scmp.ne.s32.totalorder %s52, %s53
      %p64 = scmp.eq.s32.totalorder %s18, 0
      %p65 = por %p63, %p64
      %p66 = scmp.ne.s32.totalorder %s52, %s53
      %p67 = scmp.eq.s32.totalorder %s19, 1
      %p68 = por %p66, %p67
      %p70 = scmp.ne.s32.totalorder %s53, %s69
      %p71 = scmp.eq.s32.totalorder %s19, 0
      %p72 = por %p70, %p71
      %p73 = scmp.le.s32.totalorder 1, %s13
      %p74 = scmp.lt.s32.totalorder %s13, 3
      %p75 = pnand %p73, %p74
      %p76 = pneg %p75
      // Predicated region
      $region9: #{tpu_custom_call.1} parent=5 // pred_check
        _
      $region10: #{tpu_custom_call.1} parent=5 // pred_check_branch
        %78 = sbr.rel (%p75) target = $region12
      $region11: #{tpu_custom_call.1} parent=5 // pred_region
        %s79 = ssub.s32 %s13, 1
      $region12: #{tpu_custom_call.1} parent=5 // pred_fallthru
        _
      %p80 = scmp.lt.s32.totalorder %s13, 2
      // Predicated region
      $region13: #{tpu_custom_call.1} parent=5 // pred_check
        %p81 = pneg %p80
      $region14: #{tpu_custom_call.1} parent=5 // pred_check_branch
        %83 = sbr.rel (%p81) target = $region16
      $region15: #{tpu_custom_call.1} parent=5 // pred_region
        // Predicated region
        $region17: #{tpu_custom_call.1} parent=15 // pred_check
          %p84 = pneg %p33
        $region18: #{tpu_custom_call.1} parent=15 // pred_check_branch
          %86 = sbr.rel (%p84) target = $region20
        $region19: #{tpu_custom_call.1} parent=15 // pred_region
          %s87 = sand.u32 %s23, 1
          %s88 = scalar_lea.sflag [#allocation3], %s87
          %s89 = sand.u32 %s23, 1
          %s90 = smul.addr %s89, 1024
          %s91 = scalar_lea.vmem [#allocation2], %s90
          %s92 = smul.u32 128, %s13
          %94 = vsyncadd %s88, 0
          %s95 = smul.addr %s92, 8
          %s96 = scalar_lea.hbm %s0, %s95
          %s97 = sshll.u32 %s96, 4
          %s98 = int_to_ptr.hbm [resolvable:$true] %s97
          %s99 = sshll.u32 %s91, 4
          %s100 = int_to_ptr.vmem [resolvable:$true] %s99
          %105 = dma.hbm_to_vmem [thread:$0]  %s98, 16384, %s100, %s88, 128, 128, 8
        $region20: #{tpu_custom_call.1} parent=15 // pred_fallthru
          _
      $region16: #{tpu_custom_call.1} parent=5 // pred_fallthru
        _
      %p106 = scmp.le.s32.totalorder 1, %s13
      %p107 = scmp.lt.s32.totalorder %s13, 3
      %p108 = pnand %p106, %p107
      %p109 = pneg %p108
      // Predicated region
      $region21: #{tpu_custom_call.1} parent=5 // pred_check
        _
      $region22: #{tpu_custom_call.1} parent=5 // pred_check_branch
        %111 = sbr.rel (%p108) target = $region24
      $region23: #{tpu_custom_call.1} parent=5 // pred_region
        %s112 = ssub.s32 %s13, 1
        %s113 = sand.u32 %s26, 1
        %s114 = scalar_lea.sflag [#allocation3], %s113
        %s115 = sand.u32 %s26, 1
        %s116 = smul.addr %s115, 1024
        %s117 = scalar_lea.vmem [#allocation2], %s116
        // Predicated region
        $region25: #{tpu_custom_call.1} parent=23 // pred_check
          %p118 = pneg %p39
        $region26: #{tpu_custom_call.1} parent=23 // pred_check_branch
          %120 = sbr.rel (%p118) target = $region28
        $region27: #{tpu_custom_call.1} parent=23 // pred_region
          %122 = dma.done %s114, 16384
        $region28: #{tpu_custom_call.1} parent=23 // pred_fallthru
          _
        %s123 = sand.u32 %s26, 1
        %s124 = scalar_lea.sflag [#allocation3], %s123
        %s125 = sand.u32 %s26, 1
        %s126 = smul.addr %s125, 1024
        %s127 = scalar_lea.vmem [#allocation2], %s126
        %p128 = pneg %p39
        %p129 = pneg %p36
        %p130 = pneg %p65
        %p131 = pneg %p62
        %s132 = sand.u32 %s52, 1
        %s133 = scalar_lea.sflag [#allocation4], %s132
        %s134 = sand.u32 %s52, 1
        %s135 = smul.addr %s134, 1024
        %s136 = scalar_lea.vmem [#allocation5], %s135
        %s137 = smul.u32 128, %s18
        %s138 = smul.u32 128, %s18
        %v139 = vld [vmem:[%s117] sm:$0xff]
        %v140 = vld [vmem:[%s117 + $0x8] sm:$0xff]
        %v141 = vld [vmem:[%s117 + $0x10] sm:$0xff]
        %v142 = vld [vmem:[%s117 + $0x18] sm:$0xff]
        %v143 = vld [vmem:[%s117 + $0x20] sm:$0xff]
        %v144 = vld [vmem:[%s117 + $0x28] sm:$0xff]
        %v145 = vld [vmem:[%s117 + $0x30] sm:$0xff]
        %v146 = vld [vmem:[%s117 + $0x38] sm:$0xff]
        %v147 = vld [vmem:[%s117 + $0x40] sm:$0xff]
        %v148 = vld [vmem:[%s117 + $0x48] sm:$0xff]
        %v149 = vld [vmem:[%s117 + $0x50] sm:$0xff]
        %v150 = vld [vmem:[%s117 + $0x58] sm:$0xff]
        %v151 = vld [vmem:[%s117 + $0x60] sm:$0xff]
        %v152 = vld [vmem:[%s117 + $0x68] sm:$0xff]
        %v153 = vld [vmem:[%s117 + $0x70] sm:$0xff]
        %v154 = vld [vmem:[%s117 + $0x78] sm:$0xff]
        %v155 = vld [vmem:[%s117 + $0x80] sm:$0xff]
        %v156 = vld [vmem:[%s117 + $0x88] sm:$0xff]
        %v157 = vld [vmem:[%s117 + $0x90] sm:$0xff]
        %v158 = vld [vmem:[%s117 + $0x98] sm:$0xff]
        %v159 = vld [vmem:[%s117 + $0xa0] sm:$0xff]
        %v160 = vld [vmem:[%s117 + $0xa8] sm:$0xff]
        %v161 = vld [vmem:[%s117 + $0xb0] sm:$0xff]
        %v162 = vld [vmem:[%s117 + $0xb8] sm:$0xff]
        %v163 = vld [vmem:[%s117 + $0xc0] sm:$0xff]
        %v164 = vld [vmem:[%s117 + $0xc8] sm:$0xff]
        %v165 = vld [vmem:[%s117 + $0xd0] sm:$0xff]
        %v166 = vld [vmem:[%s117 + $0xd8] sm:$0xff]
        %v167 = vld [vmem:[%s117 + $0xe0] sm:$0xff]
        %v168 = vld [vmem:[%s117 + $0xe8] sm:$0xff]
        %v169 = vld [vmem:[%s117 + $0xf0] sm:$0xff]
        %v170 = vld [vmem:[%s117 + $0xf8] sm:$0xff]
        %v171 = vld [vmem:[%s117 + $0x100] sm:$0xff]
        %v172 = vld [vmem:[%s117 + $0x108] sm:$0xff]
        %v173 = vld [vmem:[%s117 + $0x110] sm:$0xff]
        %v174 = vld [vmem:[%s117 + $0x118] sm:$0xff]
        %v175 = vld [vmem:[%s117 + $0x120] sm:$0xff]
        %v176 = vld [vmem:[%s117 + $0x128] sm:$0xff]
        %v177 = vld [vmem:[%s117 + $0x130] sm:$0xff]
        %v178 = vld [vmem:[%s117 + $0x138] sm:$0xff]
        %v179 = vld [vmem:[%s117 + $0x140] sm:$0xff]
        %v180 = vld [vmem:[%s117 + $0x148] sm:$0xff]
        %v181 = vld [vmem:[%s117 + $0x150] sm:$0xff]
        %v182 = vld [vmem:[%s117 + $0x158] sm:$0xff]
        %v183 = vld [vmem:[%s117 + $0x160] sm:$0xff]
        %v184 = vld [vmem:[%s117 + $0x168] sm:$0xff]
        %v185 = vld [vmem:[%s117 + $0x170] sm:$0xff]
        %v186 = vld [vmem:[%s117 + $0x178] sm:$0xff]
        %v187 = vld [vmem:[%s117 + $0x180] sm:$0xff]
        %v188 = vld [vmem:[%s117 + $0x188] sm:$0xff]
        %v189 = vld [vmem:[%s117 + $0x190] sm:$0xff]
        %v190 = vld [vmem:[%s117 + $0x198] sm:$0xff]
        %v191 = vld [vmem:[%s117 + $0x1a0] sm:$0xff]
        %v192 = vld [vmem:[%s117 + $0x1a8] sm:$0xff]
        %v193 = vld [vmem:[%s117 + $0x1b0] sm:$0xff]
        %v194 = vld [vmem:[%s117 + $0x1b8] sm:$0xff]
        %v195 = vld [vmem:[%s117 + $0x1c0] sm:$0xff]
        %v196 = vld [vmem:[%s117 + $0x1c8] sm:$0xff]
        %v197 = vld [vmem:[%s117 + $0x1d0] sm:$0xff]
        %v198 = vld [vmem:[%s117 + $0x1d8] sm:$0xff]
        %v199 = vld [vmem:[%s117 + $0x1e0] sm:$0xff]
        %v200 = vld [vmem:[%s117 + $0x1e8] sm:$0xff]
        %v201 = vld [vmem:[%s117 + $0x1f0] sm:$0xff]
        %v202 = vld [vmem:[%s117 + $0x1f8] sm:$0xff]
        %v203 = vld [vmem:[%s117 + $0x200] sm:$0xff]
        %v204 = vld [vmem:[%s117 + $0x208] sm:$0xff]
        %v205 = vld [vmem:[%s117 + $0x210] sm:$0xff]
        %v206 = vld [vmem:[%s117 + $0x218] sm:$0xff]
        %v207 = vld [vmem:[%s117 + $0x220] sm:$0xff]
        %v208 = vld [vmem:[%s117 + $0x228] sm:$0xff]
        %v209 = vld [vmem:[%s117 + $0x230] sm:$0xff]
        %v210 = vld [vmem:[%s117 + $0x238] sm:$0xff]
        %v211 = vld [vmem:[%s117 + $0x240] sm:$0xff]
        %v212 = vld [vmem:[%s117 + $0x248] sm:$0xff]
        %v213 = vld [vmem:[%s117 + $0x250] sm:$0xff]
        %v214 = vld [vmem:[%s117 + $0x258] sm:$0xff]
        %v215 = vld [vmem:[%s117 + $0x260] sm:$0xff]
        %v216 = vld [vmem:[%s117 + $0x268] sm:$0xff]
        %v217 = vld [vmem:[%s117 + $0x270] sm:$0xff]
        %v218 = vld [vmem:[%s117 + $0x278] sm:$0xff]
        %v219 = vld [vmem:[%s117 + $0x280] sm:$0xff]
        %v220 = vld [vmem:[%s117 + $0x288] sm:$0xff]
        %v221 = vld [vmem:[%s117 + $0x290] sm:$0xff]
        %v222 = vld [vmem:[%s117 + $0x298] sm:$0xff]
        %v223 = vld [vmem:[%s117 + $0x2a0] sm:$0xff]
        %v224 = vld [vmem:[%s117 + $0x2a8] sm:$0xff]
        %v225 = vld [vmem:[%s117 + $0x2b0] sm:$0xff]
        %v226 = vld [vmem:[%s117 + $0x2b8] sm:$0xff]
        %v227 = vld [vmem:[%s117 + $0x2c0] sm:$0xff]
        %v228 = vld [vmem:[%s117 + $0x2c8] sm:$0xff]
        %v229 = vld [vmem:[%s117 + $0x2d0] sm:$0xff]
        %v230 = vld [vmem:[%s117 + $0x2d8] sm:$0xff]
        %v231 = vld [vmem:[%s117 + $0x2e0] sm:$0xff]
        %v232 = vld [vmem:[%s117 + $0x2e8] sm:$0xff]
        %v233 = vld [vmem:[%s117 + $0x2f0] sm:$0xff]
        %v234 = vld [vmem:[%s117 + $0x2f8] sm:$0xff]
        %v235 = vld [vmem:[%s117 + $0x300] sm:$0xff]
        %v236 = vld [vmem:[%s117 + $0x308] sm:$0xff]
        %v237 = vld [vmem:[%s117 + $0x310] sm:$0xff]
        %v238 = vld [vmem:[%s117 + $0x318] sm:$0xff]
        %v239 = vld [vmem:[%s117 + $0x320] sm:$0xff]
        %v240 = vld [vmem:[%s117 + $0x328] sm:$0xff]
        %v241 = vld [vmem:[%s117 + $0x330] sm:$0xff]
        %v242 = vld [vmem:[%s117 + $0x338] sm:$0xff]
        %v243 = vld [vmem:[%s117 + $0x340] sm:$0xff]
        %v244 = vld [vmem:[%s117 + $0x348] sm:$0xff]
        %v245 = vld [vmem:[%s117 + $0x350] sm:$0xff]
        %v246 = vld [vmem:[%s117 + $0x358] sm:$0xff]
        %v247 = vld [vmem:[%s117 + $0x360] sm:$0xff]
        %v248 = vld [vmem:[%s117 + $0x368] sm:$0xff]
        %v249 = vld [vmem:[%s117 + $0x370] sm:$0xff]
        %v250 = vld [vmem:[%s117 + $0x378] sm:$0xff]
        %v251 = vld [vmem:[%s117 + $0x380] sm:$0xff]
        %v252 = vld [vmem:[%s117 + $0x388] sm:$0xff]
        %v253 = vld [vmem:[%s117 + $0x390] sm:$0xff]
        %v254 = vld [vmem:[%s117 + $0x398] sm:$0xff]
        %v255 = vld [vmem:[%s117 + $0x3a0] sm:$0xff]
        %v256 = vld [vmem:[%s117 + $0x3a8] sm:$0xff]
        %v257 = vld [vmem:[%s117 + $0x3b0] sm:$0xff]
        %v258 = vld [vmem:[%s117 + $0x3b8] sm:$0xff]
        %v259 = vld [vmem:[%s117 + $0x3c0] sm:$0xff]
        %v260 = vld [vmem:[%s117 + $0x3c8] sm:$0xff]
        %v261 = vld [vmem:[%s117 + $0x3d0] sm:$0xff]
        %v262 = vld [vmem:[%s117 + $0x3d8] sm:$0xff]
        %v263 = vld [vmem:[%s117 + $0x3e0] sm:$0xff]
        %v264 = vld [vmem:[%s117 + $0x3e8] sm:$0xff]
        %v265 = vld [vmem:[%s117 + $0x3f0] sm:$0xff]
        %v266 = vld [vmem:[%s117 + $0x3f8] sm:$0xff]
        %v267 = vtanh.pop %v139
        %v268 = vtanh.pop %v140
        %v269 = vtanh.pop %v141
        %v270 = vtanh.pop %v142
        %v271 = vtanh.pop %v143
        %v272 = vtanh.pop %v144
        %v273 = vtanh.pop %v145
        %v274 = vtanh.pop %v146
        %v275 = vtanh.pop %v147
        %v276 = vtanh.pop %v148
        %v277 = vtanh.pop %v149
        %v278 = vtanh.pop %v150
        %v279 = vtanh.pop %v151
        %v280 = vtanh.pop %v152
        %v281 = vtanh.pop %v153
        %v282 = vtanh.pop %v154
        %v283 = vtanh.pop %v155
        %v284 = vtanh.pop %v156
        %v285 = vtanh.pop %v157
        %v286 = vtanh.pop %v158
        %v287 = vtanh.pop %v159
        %v288 = vtanh.pop %v160
        %v289 = vtanh.pop %v161
        %v290 = vtanh.pop %v162
        %v291 = vtanh.pop %v163
        %v292 = vtanh.pop %v164
        %v293 = vtanh.pop %v165
        %v294 = vtanh.pop %v166
        %v295 = vtanh.pop %v167
        %v296 = vtanh.pop %v168
        %v297 = vtanh.pop %v169
        %v298 = vtanh.pop %v170
        %v299 = vtanh.pop %v171
        %v300 = vtanh.pop %v172
        %v301 = vtanh.pop %v173
        %v302 = vtanh.pop %v174
        %v303 = vtanh.pop %v175
        %v304 = vtanh.pop %v176
        %v305 = vtanh.pop %v177
        %v306 = vtanh.pop %v178
        %v307 = vtanh.pop %v179
        %v308 = vtanh.pop %v180
        %v309 = vtanh.pop %v181
        %v310 = vtanh.pop %v182
        %v311 = vtanh.pop %v183
        %v312 = vtanh.pop %v184
        %v313 = vtanh.pop %v185
        %v314 = vtanh.pop %v186
        %v315 = vtanh.pop %v187
        %v316 = vtanh.pop %v188
        %v317 = vtanh.pop %v189
        %v318 = vtanh.pop %v190
        %v319 = vtanh.pop %v191
        %v320 = vtanh.pop %v192
        %v321 = vtanh.pop %v193
        %v322 = vtanh.pop %v194
        %v323 = vtanh.pop %v195
        %v324 = vtanh.pop %v196
        %v325 = vtanh.pop %v197
        %v326 = vtanh.pop %v198
        %v327 = vtanh.pop %v199
        %v328 = vtanh.pop %v200
        %v329 = vtanh.pop %v201
        %v330 = vtanh.pop %v202
        %v331 = vtanh.pop %v203
        %v332 = vtanh.pop %v204
        %v333 = vtanh.pop %v205
        %v334 = vtanh.pop %v206
        %v335 = vtanh.pop %v207
        %v336 = vtanh.pop %v208
        %v337 = vtanh.pop %v209
        %v338 = vtanh.pop %v210
        %v339 = vtanh.pop %v211
        %v340 = vtanh.pop %v212
        %v341 = vtanh.pop %v213
        %v342 = vtanh.pop %v214
        %v343 = vtanh.pop %v215
        %v344 = vtanh.pop %v216
        %v345 = vtanh.pop %v217
        %v346 = vtanh.pop %v218
        %v347 = vtanh.pop %v219
        %v348 = vtanh.pop %v220
        %v349 = vtanh.pop %v221
        %v350 = vtanh.pop %v222
        %v351 = vtanh.pop %v223
        %v352 = vtanh.pop %v224
        %v353 = vtanh.pop %v225
        %v354 = vtanh.pop %v226
        %v355 = vtanh.pop %v227
        %v356 = vtanh.pop %v228
        %v357 = vtanh.pop %v229
        %v358 = vtanh.pop %v230
        %v359 = vtanh.pop %v231
        %v360 = vtanh.pop %v232
        %v361 = vtanh.pop %v233
        %v362 = vtanh.pop %v234
        %v363 = vtanh.pop %v235
        %v364 = vtanh.pop %v236
        %v365 = vtanh.pop %v237
        %v366 = vtanh.pop %v238
        %v367 = vtanh.pop %v239
        %v368 = vtanh.pop %v240
        %v369 = vtanh.pop %v241
        %v370 = vtanh.pop %v242
        %v371 = vtanh.pop %v243
        %v372 = vtanh.pop %v244
        %v373 = vtanh.pop %v245
        %v374 = vtanh.pop %v246
        %v375 = vtanh.pop %v247
        %v376 = vtanh.pop %v248
        %v377 = vtanh.pop %v249
        %v378 = vtanh.pop %v250
        %v379 = vtanh.pop %v251
        %v380 = vtanh.pop %v252
        %v381 = vtanh.pop %v253
        %v382 = vtanh.pop %v254
        %v383 = vtanh.pop %v255
        %v384 = vtanh.pop %v256
        %v385 = vtanh.pop %v257
        %v386 = vtanh.pop %v258
        %v387 = vtanh.pop %v259
        %v388 = vtanh.pop %v260
        %v389 = vtanh.pop %v261
        %v390 = vtanh.pop %v262
        %v391 = vtanh.pop %v263
        %v392 = vtanh.pop %v264
        %v393 = vtanh.pop %v265
        %v394 = vtanh.pop %v266
        %395 = vst [vmem:[%s136] sm:$0xff] %v267
        %396 = vst [vmem:[%s136 + $0x8] sm:$0xff] %v268
        %397 = vst [vmem:[%s136 + $0x10] sm:$0xff] %v269
        %398 = vst [vmem:[%s136 + $0x18] sm:$0xff] %v270
        %399 = vst [vmem:[%s136 + $0x20] sm:$0xff] %v271
        %400 = vst [vmem:[%s136 + $0x28] sm:$0xff] %v272
        %401 = vst [vmem:[%s136 + $0x30] sm:$0xff] %v273
        %402 = vst [vmem:[%s136 + $0x38] sm:$0xff] %v274
        %403 = vst [vmem:[%s136 + $0x40] sm:$0xff] %v275
        %404 = vst [vmem:[%s136 + $0x48] sm:$0xff] %v276
        %405 = vst [vmem:[%s136 + $0x50] sm:$0xff] %v277
        %406 = vst [vmem:[%s136 + $0x58] sm:$0xff] %v278
        %407 = vst [vmem:[%s136 + $0x60] sm:$0xff] %v279
        %408 = vst [vmem:[%s136 + $0x68] sm:$0xff] %v280
        %409 = vst [vmem:[%s136 + $0x70] sm:$0xff] %v281
        %410 = vst [vmem:[%s136 + $0x78] sm:$0xff] %v282
        %411 = vst [vmem:[%s136 + $0x80] sm:$0xff] %v283
        %412 = vst [vmem:[%s136 + $0x88] sm:$0xff] %v284
        %413 = vst [vmem:[%s136 + $0x90] sm:$0xff] %v285
        %414 = vst [vmem:[%s136 + $0x98] sm:$0xff] %v286
        %415 = vst [vmem:[%s136 + $0xa0] sm:$0xff] %v287
        %416 = vst [vmem:[%s136 + $0xa8] sm:$0xff] %v288
        %417 = vst [vmem:[%s136 + $0xb0] sm:$0xff] %v289
        %418 = vst [vmem:[%s136 + $0xb8] sm:$0xff] %v290
        %419 = vst [vmem:[%s136 + $0xc0] sm:$0xff] %v291
        %420 = vst [vmem:[%s136 + $0xc8] sm:$0xff] %v292
        %421 = vst [vmem:[%s136 + $0xd0] sm:$0xff] %v293
        %422 = vst [vmem:[%s136 + $0xd8] sm:$0xff] %v294
        %423 = vst [vmem:[%s136 + $0xe0] sm:$0xff] %v295
        %424 = vst [vmem:[%s136 + $0xe8] sm:$0xff] %v296
        %425 = vst [vmem:[%s136 + $0xf0] sm:$0xff] %v297
        %426 = vst [vmem:[%s136 + $0xf8] sm:$0xff] %v298
        %427 = vst [vmem:[%s136 + $0x100] sm:$0xff] %v299
        %428 = vst [vmem:[%s136 + $0x108] sm:$0xff] %v300
        %429 = vst [vmem:[%s136 + $0x110] sm:$0xff] %v301
        %430 = vst [vmem:[%s136 + $0x118] sm:$0xff] %v302
        %431 = vst [vmem:[%s136 + $0x120] sm:$0xff] %v303
        %432 = vst [vmem:[%s136 + $0x128] sm:$0xff] %v304
        %433 = vst [vmem:[%s136 + $0x130] sm:$0xff] %v305
        %434 = vst [vmem:[%s136 + $0x138] sm:$0xff] %v306
        %435 = vst [vmem:[%s136 + $0x140] sm:$0xff] %v307
        %436 = vst [vmem:[%s136 + $0x148] sm:$0xff] %v308
        %437 = vst [vmem:[%s136 + $0x150] sm:$0xff] %v309
        %438 = vst [vmem:[%s136 + $0x158] sm:$0xff] %v310
        %439 = vst [vmem:[%s136 + $0x160] sm:$0xff] %v311
        %440 = vst [vmem:[%s136 + $0x168] sm:$0xff] %v312
        %441 = vst [vmem:[%s136 + $0x170] sm:$0xff] %v313
        %442 = vst [vmem:[%s136 + $0x178] sm:$0xff] %v314
        %443 = vst [vmem:[%s136 + $0x180] sm:$0xff] %v315
        %444 = vst [vmem:[%s136 + $0x188] sm:$0xff] %v316
        %445 = vst [vmem:[%s136 + $0x190] sm:$0xff] %v317
        %446 = vst [vmem:[%s136 + $0x198] sm:$0xff] %v318
        %447 = vst [vmem:[%s136 + $0x1a0] sm:$0xff] %v319
        %448 = vst [vmem:[%s136 + $0x1a8] sm:$0xff] %v320
        %449 = vst [vmem:[%s136 + $0x1b0] sm:$0xff] %v321
        %450 = vst [vmem:[%s136 + $0x1b8] sm:$0xff] %v322
        %451 = vst [vmem:[%s136 + $0x1c0] sm:$0xff] %v323
        %452 = vst [vmem:[%s136 + $0x1c8] sm:$0xff] %v324
        %453 = vst [vmem:[%s136 + $0x1d0] sm:$0xff] %v325
        %454 = vst [vmem:[%s136 + $0x1d8] sm:$0xff] %v326
        %455 = vst [vmem:[%s136 + $0x1e0] sm:$0xff] %v327
        %456 = vst [vmem:[%s136 + $0x1e8] sm:$0xff] %v328
        %457 = vst [vmem:[%s136 + $0x1f0] sm:$0xff] %v329
        %458 = vst [vmem:[%s136 + $0x1f8] sm:$0xff] %v330
        %459 = vst [vmem:[%s136 + $0x200] sm:$0xff] %v331
        %460 = vst [vmem:[%s136 + $0x208] sm:$0xff] %v332
        %461 = vst [vmem:[%s136 + $0x210] sm:$0xff] %v333
        %462 = vst [vmem:[%s136 + $0x218] sm:$0xff] %v334
        %463 = vst [vmem:[%s136 + $0x220] sm:$0xff] %v335
        %464 = vst [vmem:[%s136 + $0x228] sm:$0xff] %v336
        %465 = vst [vmem:[%s136 + $0x230] sm:$0xff] %v337
        %466 = vst [vmem:[%s136 + $0x238] sm:$0xff] %v338
        %467 = vst [vmem:[%s136 + $0x240] sm:$0xff] %v339
        %468 = vst [vmem:[%s136 + $0x248] sm:$0xff] %v340
        %469 = vst [vmem:[%s136 + $0x250] sm:$0xff] %v341
        %470 = vst [vmem:[%s136 + $0x258] sm:$0xff] %v342
        %471 = vst [vmem:[%s136 + $0x260] sm:$0xff] %v343
        %472 = vst [vmem:[%s136 + $0x268] sm:$0xff] %v344
        %473 = vst [vmem:[%s136 + $0x270] sm:$0xff] %v345
        %474 = vst [vmem:[%s136 + $0x278] sm:$0xff] %v346
        %475 = vst [vmem:[%s136 + $0x280] sm:$0xff] %v347
        %476 = vst [vmem:[%s136 + $0x288] sm:$0xff] %v348
        %477 = vst [vmem:[%s136 + $0x290] sm:$0xff] %v349
        %478 = vst [vmem:[%s136 + $0x298] sm:$0xff] %v350
        %479 = vst [vmem:[%s136 + $0x2a0] sm:$0xff] %v351
        %480 = vst [vmem:[%s136 + $0x2a8] sm:$0xff] %v352
        %481 = vst [vmem:[%s136 + $0x2b0] sm:$0xff] %v353
        %482 = vst [vmem:[%s136 + $0x2b8] sm:$0xff] %v354
        %483 = vst [vmem:[%s136 + $0x2c0] sm:$0xff] %v355
        %484 = vst [vmem:[%s136 + $0x2c8] sm:$0xff] %v356
        %485 = vst [vmem:[%s136 + $0x2d0] sm:$0xff] %v357
        %486 = vst [vmem:[%s136 + $0x2d8] sm:$0xff] %v358
        %487 = vst [vmem:[%s136 + $0x2e0] sm:$0xff] %v359
        %488 = vst [vmem:[%s136 + $0x2e8] sm:$0xff] %v360
        %489 = vst [vmem:[%s136 + $0x2f0] sm:$0xff] %v361
        %490 = vst [vmem:[%s136 + $0x2f8] sm:$0xff] %v362
        %491 = vst [vmem:[%s136 + $0x300] sm:$0xff] %v363
        %492 = vst [vmem:[%s136 + $0x308] sm:$0xff] %v364
        %493 = vst [vmem:[%s136 + $0x310] sm:$0xff] %v365
        %494 = vst [vmem:[%s136 + $0x318] sm:$0xff] %v366
        %495 = vst [vmem:[%s136 + $0x320] sm:$0xff] %v367
        %496 = vst [vmem:[%s136 + $0x328] sm:$0xff] %v368
        %497 = vst [vmem:[%s136 + $0x330] sm:$0xff] %v369
        %498 = vst [vmem:[%s136 + $0x338] sm:$0xff] %v370
        %499 = vst [vmem:[%s136 + $0x340] sm:$0xff] %v371
        %500 = vst [vmem:[%s136 + $0x348] sm:$0xff] %v372
        %501 = vst [vmem:[%s136 + $0x350] sm:$0xff] %v373
        %502 = vst [vmem:[%s136 + $0x358] sm:$0xff] %v374
        %503 = vst [vmem:[%s136 + $0x360] sm:$0xff] %v375
        %504 = vst [vmem:[%s136 + $0x368] sm:$0xff] %v376
        %505 = vst [vmem:[%s136 + $0x370] sm:$0xff] %v377
        %506 = vst [vmem:[%s136 + $0x378] sm:$0xff] %v378
        %507 = vst [vmem:[%s136 + $0x380] sm:$0xff] %v379
        %508 = vst [vmem:[%s136 + $0x388] sm:$0xff] %v380
        %509 = vst [vmem:[%s136 + $0x390] sm:$0xff] %v381
        %510 = vst [vmem:[%s136 + $0x398] sm:$0xff] %v382
        %511 = vst [vmem:[%s136 + $0x3a0] sm:$0xff] %v383
        %512 = vst [vmem:[%s136 + $0x3a8] sm:$0xff] %v384
        %513 = vst [vmem:[%s136 + $0x3b0] sm:$0xff] %v385
        %514 = vst [vmem:[%s136 + $0x3b8] sm:$0xff] %v386
        %515 = vst [vmem:[%s136 + $0x3c0] sm:$0xff] %v387
        %516 = vst [vmem:[%s136 + $0x3c8] sm:$0xff] %v388
        %517 = vst [vmem:[%s136 + $0x3d0] sm:$0xff] %v389
        %518 = vst [vmem:[%s136 + $0x3d8] sm:$0xff] %v390
        %519 = vst [vmem:[%s136 + $0x3e0] sm:$0xff] %v391
        %520 = vst [vmem:[%s136 + $0x3e8] sm:$0xff] %v392
        %521 = vst [vmem:[%s136 + $0x3f0] sm:$0xff] %v393
        %522 = vst [vmem:[%s136 + $0x3f8] sm:$0xff] %v394
        %s523 = sand.u32 %s52, 1
        %s524 = scalar_lea.sflag [#allocation4], %s523
        %s525 = sand.u32 %s52, 1
        %s526 = smul.addr %s525, 1024
        %s527 = scalar_lea.vmem [#allocation5], %s526
        // Predicated region
        $region29: #{tpu_custom_call.1} parent=23 // pred_check
          %p528 = pneg %p62
        $region30: #{tpu_custom_call.1} parent=23 // pred_check_branch
          %530 = sbr.rel (%p528) target = $region32
        $region31: #{tpu_custom_call.1} parent=23 // pred_region
          %s531 = smul.u32 128, %s18
          %533 = vsyncadd %s524, 0
          %s534 = smul.addr %s531, 8
          %s535 = scalar_lea.hbm %s1, %s534
          %s536 = sshll.u32 %s527, 4
          %s537 = int_to_ptr.vmem [resolvable:$true] %s536
          %s538 = sshll.u32 %s535, 4
          %s539 = int_to_ptr.hbm [resolvable:$true] %s538
          %544 = dma.vmem_to_hbm [thread:$0]  %s537, 16384, %s539, %s524, 128, 128, 8
        $region32: #{tpu_custom_call.1} parent=23 // pred_fallthru
          _
      $region24: #{tpu_custom_call.1} parent=5 // pred_fallthru
        _
      %p545 = scmp.le.s32.totalorder 2, %s13
      // Predicated region
      $region33: #{tpu_custom_call.1} parent=5 // pred_check
        %p546 = pneg %p545
      $region34: #{tpu_custom_call.1} parent=5 // pred_check_branch
        %548 = sbr.rel (%p546) target = $region36
      $region35: #{tpu_custom_call.1} parent=5 // pred_region
        %s549 = ssub.s32 %s13, 2
        // Predicated region
        $region37: #{tpu_custom_call.1} parent=35 // pred_check
          %p550 = pneg %p68
        $region38: #{tpu_custom_call.1} parent=35 // pred_check_branch
          %552 = sbr.rel (%p550) target = $region40
        $region39: #{tpu_custom_call.1} parent=35 // pred_region
          %s553 = sand.u32 %s53, 1
          %s554 = scalar_lea.sflag [#allocation4], %s553
          %s555 = sand.u32 %s53, 1
          %s556 = smul.addr %s555, 1024
          %s557 = scalar_lea.vmem [#allocation5], %s556
          %559 = dma.done %s554, 16384
        $region40: #{tpu_custom_call.1} parent=35 // pred_fallthru
          _
      $region36: #{tpu_custom_call.1} parent=5 // pred_fallthru
        _
    $region6: #{tpu_custom_call.1} parent=1 // loop_footer
      %s17 = sadd.s32 1, %s13
    $region7: #{tpu_custom_call.1} parent=1 // loop_footer_branch
      %12 = sbr.rel target = $region3
    $region8: #{tpu_custom_call.1} parent=1 // loop_exit
      _
    %560 = vsyncpa [#allocation3], 1
    %s561 = scalar_lea.sflag [#allocation3], 1
    %562 = vsyncpa %s561, 1
    %563 = vsyncpa [#allocation4], 1
    %s564 = scalar_lea.sflag [#allocation4], 1
    %565 = vsyncpa %s564, 1

</llo_original>
